<compile_context>
chip_gen: v7x
topology: tpu7x:2x2x1
jax: 0.10.0
libtpu: 0.0.40
codegen_flags: <defaults>
</compile_context>

<pallas_src>
import functools

import jax
import jax.numpy as jnp
from jax.experimental import pallas as pl
from jax.experimental.pallas import tpu as pltpu


def _round_up(n, m):
    return ((n + m - 1) // m) * m


def _two_tensorcores_per_chip():
    """True on chips where dimension_semantics=('parallel',) shards grid steps
    across 2 TensorCores (v7x; v4/v5p megacore). v5e/v6e have 1 TC."""
    try:
        kind = jax.devices()[0].device_kind.lower()
    except Exception:  # pragma: no cover - defensive
        return False
    return any(tag in kind for tag in ("v7", "v4", "v5p"))


def _qnet_kernel(x_ref, w1_ref, b1_ref, w2_ref, b2_ref, w3_ref, b3_ref, o_ref):
    # fc1 + relu  (bf16 operands -> f32 accumulate on the MXU; VPU math in f32)
    x = x_ref[...].astype(w1_ref.dtype)
    h1 = jnp.dot(x, w1_ref[...], preferred_element_type=jnp.float32)
    h1 = jnp.maximum(h1 + b1_ref[...], 0.0)
    # fc2 + relu
    h2 = jnp.dot(h1.astype(w2_ref.dtype), w2_ref[...],
                 preferred_element_type=jnp.float32)
    h2 = jnp.maximum(h2 + b2_ref[...], 0.0)
    # fc3 (no activation)
    o = jnp.dot(h2.astype(w3_ref.dtype), w3_ref[...],
                preferred_element_type=jnp.float32)
    o_ref[...] = (o + b3_ref[...]).astype(o_ref.dtype)


def prepare_kernel_params(params, weight_dtype=jnp.bfloat16):
    """One-time conversion of f32 (in_features, out_features) params into the
    kernel layout: weight_dtype weights, (1, out) f32 biases.  Do this at
    init / checkpoint-load time, NOT inside the per-step forward.  Pass
    weight_dtype=jnp.float32 if exact f32 matmul parity is required."""
    return {
        "w1": params["w1"].astype(weight_dtype),
        "w2": params["w2"].astype(weight_dtype),
        "w3": params["w3"].astype(weight_dtype),
        "b1": params["b1"].reshape(1, -1).astype(jnp.float32),
        "b2": params["b2"].reshape(1, -1).astype(jnp.float32),
        "b3": params["b3"].reshape(1, -1).astype(jnp.float32),
    }


def _pick_tile(B, block_batch, two_core):
    """Choose (tb, Bp) so Bp is a multiple of tb (no ragged last block) and,
    on 2-TC chips, the grid has an even number (>=2) of steps when the batch
    is big enough to be worth sharding."""
    Bp_min = _round_up(max(B, 8), 8)
    if two_core and Bp_min >= 256:
        # Even number of steps >= 2 so 'parallel' sharding keeps both TCs busy.
        n_steps = 2 * pl.cdiv(Bp_min, 2 * block_batch)
        tb = _round_up(pl.cdiv(Bp_min, n_steps), 8)
    else:
        tb = min(block_batch, Bp_min)
    Bp = _round_up(Bp_min, tb)
    return tb, Bp


@functools.partial(jax.jit, static_argnames=("block_batch",))
def qnetwork_forward_pallas(state, kparams, *, block_batch=2048):
    """state: (B, state_dim) f32.  kparams: output of prepare_kernel_params."""
    B, state_dim = state.shape
    hidden = kparams["w1"].shape[1]
    action_dim = kparams["w3"].shape[1]

    tb, Bp = _pick_tile(B, block_batch, _two_tensorcores_per_chip())
    if Bp != B:
        state = jnp.pad(state, ((0, Bp - B), (0, 0)))
    grid = (Bp // tb,)  # exact: Bp is a multiple of tb, no masked last block

    w_bytes = kparams["w1"].dtype.itemsize
    weight_bytes = w_bytes * (state_dim * hidden + hidden * hidden
                              + hidden * action_dim)
    cost = pl.CostEstimate(
        flops=2 * Bp * (state_dim * hidden + hidden * hidden + hidden * action_dim),
        transcendentals=0,
        bytes_accessed=4 * Bp * (state_dim + action_dim)
                       + weight_bytes + 4 * (2 * hidden + action_dim),
    )

    const = lambda shape: pl.BlockSpec(shape, lambda i: (0,) * len(shape))

    out = pl.pallas_call(
        _qnet_kernel,
        out_shape=jax.ShapeDtypeStruct((Bp, action_dim), jnp.float32),
        grid=grid,
        in_specs=[
            pl.BlockSpec((tb, state_dim), lambda i: (i, 0)),  # x tile (pipelined)
            const((state_dim, hidden)),                       # w1 (VMEM-resident)
            const((1, hidden)),                               # b1
            const((hidden, hidden)),                          # w2
            const((1, hidden)),                               # b2
            const((hidden, action_dim)),                      # w3
            const((1, action_dim)),                           # b3
        ],
        out_specs=pl.BlockSpec((tb, action_dim), lambda i: (i, 0)),
        compiler_params=pltpu.CompilerParams(
            dimension_semantics=("parallel",),   # 2-TC sharding on v7x/megacore
            vmem_limit_bytes=48 * 1024 * 1024,   # clear v5e's 16 MiB scoped default
        ),
        cost_estimate=cost,
    )(state, kparams["w1"], kparams["b1"], kparams["w2"], kparams["b2"],
      kparams["w3"], kparams["b3"])

    return out[:B] if Bp != B else out


def qnetwork_reference(state, params):
    """Pure-JAX f32 reference of the PyTorch forward."""
    x = jnp.maximum(state @ params["w1"] + params["b1"], 0.0)
    x = jnp.maximum(x @ params["w2"] + params["b2"], 0.0)
    return x @ params["w3"] + params["b3"]


def qnetwork_forward(state, params, kparams=None, *, pallas_min_batch=65):
    """Dispatcher: XLA's fused dot chain for tiny act()-style batches (launch +
    pipeline overhead dominates there), Pallas kernel for training batches."""
    if kparams is None or state.shape[0] < pallas_min_batch:
        return qnetwork_reference(state, params)
    return qnetwork_forward_pallas(state, kparams)


def init_qnetwork_params(key, state_dim, action_dim, hidden=64):
    """nn.Linear-style init: U(-1/sqrt(fan_in), 1/sqrt(fan_in)); weights stored
    as (in_features, out_features) so the kernel computes x @ W + b."""
    ks = jax.random.split(key, 6)

    def linear(kw, kb, fan_in, fan_out):
        bound = 1.0 / jnp.sqrt(fan_in)
        w = jax.random.uniform(kw, (fan_in, fan_out), jnp.float32, -bound, bound)
        b = jax.random.uniform(kb, (fan_out,), jnp.float32, -bound, bound)
        return w, b

    w1, b1 = linear(ks[0], ks[1], state_dim, hidden)
    w2, b2 = linear(ks[2], ks[3], hidden, hidden)
    w3, b3 = linear(ks[4], ks[5], hidden, action_dim)
    return {"w1": w1, "b1": b1, "w2": w2, "b2": b2, "w3": w3, "b3": b3}


if __name__ == "__main__":
    key = jax.random.PRNGKey(0)
    k_params, k_small, k_large = jax.random.split(key, 3)

    state_dim, action_dim = 4, 2  # CartPole-like
    params = init_qnetwork_params(k_params, state_dim, action_dim)
    kparams = prepare_kernel_params(params)  # once, at parameter-load time

    # small act()-style batch, forced through the Pallas path
    s_small = jax.random.normal(k_small, (2, state_dim), jnp.float32)
    out_small = jax.block_until_ready(qnetwork_forward_pallas(s_small, kparams))
    ref_small = qnetwork_reference(s_small, params)
    assert out_small.shape == (2, action_dim)
    # bf16 matmul operands -> relaxed tolerance vs the f32 reference
    assert jnp.allclose(out_small, ref_small, atol=3e-2, rtol=3e-2), (out_small, ref_small)

    # training-style batch: exercises the multi-step / 2-TC pipelined batch grid
    s_large = jax.random.normal(k_large, (1024, state_dim), jnp.float32)
    out_large = jax.block_until_ready(qnetwork_forward_pallas(s_large, kparams))
    ref_large = qnetwork_reference(s_large, params)
    assert out_large.shape == (1024, action_dim)
    assert jnp.allclose(out_large, ref_large, atol=3e-2, rtol=3e-2)

    # dispatcher smoke test (tiny batch takes the pure-XLA fast path)
    _ = jax.block_until_ready(qnetwork_forward(s_small, params, kparams))

    print("KERNEL_OK")
</pallas_src>

<mosaic_0001>
module attributes {stable_mosaic.version = 11 : i64} {
  func.func @_qnet_kernel(%arg0: i32, %arg1: memref<8x4xf32, #tpu.memory_space<vmem>>, %arg2: memref<4x64xbf16, #tpu.memory_space<vmem>>, %arg3: memref<1x64xf32, #tpu.memory_space<vmem>>, %arg4: memref<64x64xbf16, #tpu.memory_space<vmem>>, %arg5: memref<1x64xf32, #tpu.memory_space<vmem>>, %arg6: memref<64x2xbf16, #tpu.memory_space<vmem>>, %arg7: memref<1x2xf32, #tpu.memory_space<vmem>>, %arg8: memref<8x2xf32, #tpu.memory_space<vmem>>) attributes {dimension_semantics = [#tpu.dimension_semantics<parallel>], iteration_bounds = array<i64: 1>, scalar_prefetch = 0 : i64, scratch_operands = 0 : i64, tpu.core_type = #tpu.core_type<tc>, window_params = [{transform_indices = @transform_0, window_bounds = array<i64: 8, 4>}, {pipeline_mode = #tpu.pipeline_mode<synchronous>, transform_indices = @transform_1, window_bounds = array<i64: 4, 64>}, {pipeline_mode = #tpu.pipeline_mode<synchronous>, transform_indices = @transform_2, window_bounds = array<i64: 1, 64>}, {pipeline_mode = #tpu.pipeline_mode<synchronous>, transform_indices = @transform_3, window_bounds = array<i64: 64, 64>}, {pipeline_mode = #tpu.pipeline_mode<synchronous>, transform_indices = @transform_4, window_bounds = array<i64: 1, 64>}, {pipeline_mode = #tpu.pipeline_mode<synchronous>, transform_indices = @transform_5, window_bounds = array<i64: 64, 2>}, {pipeline_mode = #tpu.pipeline_mode<synchronous>, transform_indices = @transform_6, window_bounds = array<i64: 1, 2>}, {transform_indices = @transform_7, window_bounds = array<i64: 8, 2>}]} {
    %c0 = arith.constant 0 : index
    %c0_0 = arith.constant 0 : index
    %0 = vector.load %arg1[%c0, %c0_0] : memref<8x4xf32, #tpu.memory_space<vmem>>, vector<8x4xf32>
    %1 = arith.truncf %0 : vector<8x4xf32> to vector<8x4xbf16>
    %c0_1 = arith.constant 0 : index
    %c0_2 = arith.constant 0 : index
    %2 = vector.load %arg2[%c0_1, %c0_2] : memref<4x64xbf16, #tpu.memory_space<vmem>>, vector<4x64xbf16>
    %cst = arith.constant dense<0.000000e+00> : vector<8x64xf32>
    %3 = tpu.matmul %1, %2, %cst {dimension_numbers = #tpu.dot_dimension_numbers<[1], [0], [0], [1], [0, 0, 1, 1], [], []>} : vector<8x4xbf16>, vector<4x64xbf16>, vector<8x64xf32> -> vector<8x64xf32>
    %c0_3 = arith.constant 0 : index
    %c0_4 = arith.constant 0 : index
    %4 = vector.load %arg3[%c0_3, %c0_4] : memref<1x64xf32, #tpu.memory_space<vmem>>, vector<1x64xf32>
    %5 = vector.broadcast %4 : vector<1x64xf32> to vector<8x64xf32>
    %6 = arith.addf %3, %5 : vector<8x64xf32>
    %cst_5 = arith.constant 0.000000e+00 : f32
    %7 = vector.broadcast %cst_5 : f32 to vector<8x64xf32>
    %8 = arith.maximumf %6, %7 : vector<8x64xf32>
    %9 = arith.truncf %8 : vector<8x64xf32> to vector<8x64xbf16>
    %c0_6 = arith.constant 0 : index
    %c0_7 = arith.constant 0 : index
    %10 = vector.load %arg4[%c0_6, %c0_7] : memref<64x64xbf16, #tpu.memory_space<vmem>>, vector<64x64xbf16>
    %cst_8 = arith.constant dense<0.000000e+00> : vector<8x64xf32>
    %11 = tpu.matmul %9, %10, %cst_8 {dimension_numbers = #tpu.dot_dimension_numbers<[1], [0], [0], [1], [0, 0, 1, 1], [], []>} : vector<8x64xbf16>, vector<64x64xbf16>, vector<8x64xf32> -> vector<8x64xf32>
    %c0_9 = arith.constant 0 : index
    %c0_10 = arith.constant 0 : index
    %12 = vector.load %arg5[%c0_9, %c0_10] : memref<1x64xf32, #tpu.memory_space<vmem>>, vector<1x64xf32>
    %13 = vector.broadcast %12 : vector<1x64xf32> to vector<8x64xf32>
    %14 = arith.addf %11, %13 : vector<8x64xf32>
    %cst_11 = arith.constant 0.000000e+00 : f32
    %15 = vector.broadcast %cst_11 : f32 to vector<8x64xf32>
    %16 = arith.maximumf %14, %15 : vector<8x64xf32>
    %17 = arith.truncf %16 : vector<8x64xf32> to vector<8x64xbf16>
    %c0_12 = arith.constant 0 : index
    %c0_13 = arith.constant 0 : index
    %18 = vector.load %arg6[%c0_12, %c0_13] : memref<64x2xbf16, #tpu.memory_space<vmem>>, vector<64x2xbf16>
    %cst_14 = arith.constant dense<0.000000e+00> : vector<8x2xf32>
    %19 = tpu.matmul %17, %18, %cst_14 {dimension_numbers = #tpu.dot_dimension_numbers<[1], [0], [0], [1], [0, 0, 1, 1], [], []>} : vector<8x64xbf16>, vector<64x2xbf16>, vector<8x2xf32> -> vector<8x2xf32>
    %c0_15 = arith.constant 0 : index
    %c0_16 = arith.constant 0 : index
    %20 = vector.load %arg7[%c0_15, %c0_16] : memref<1x2xf32, #tpu.memory_space<vmem>>, vector<1x2xf32>
    %21 = vector.broadcast %20 : vector<1x2xf32> to vector<8x2xf32>
    %22 = arith.addf %19, %21 : vector<8x2xf32>
    %c0_17 = arith.constant 0 : index
    %c0_18 = arith.constant 0 : index
    %23 = vector.load %arg8[%c0_17, %c0_18] : memref<8x2xf32, #tpu.memory_space<vmem>>, vector<8x2xf32>
    tpu.vector_store %arg8[%c0_17, %c0_18], %22 {strides = array<i32>} : memref<8x2xf32, #tpu.memory_space<vmem>>, vector<8x2xf32>,
    return
  }
  func.func @transform_0(%arg0: i32) -> (i32, i32) {
    %c0_i32 = arith.constant 0 : i32
    %c0_i32_0 = arith.constant 0 : i32
    return %arg0, %c0_i32 : i32, i32
  }
  func.func @transform_1(%arg0: i32) -> (i32, i32) {
    %c0_i32 = arith.constant 0 : i32
    %c0_i32_0 = arith.constant 0 : i32
    %c0_i32_1 = arith.constant 0 : i32
    return %c0_i32, %c0_i32_0 : i32, i32
  }
  func.func @transform_2(%arg0: i32) -> (i32, i32) {
    %c0_i32 = arith.constant 0 : i32
    %c0_i32_0 = arith.constant 0 : i32
    %c0_i32_1 = arith.constant 0 : i32
    return %c0_i32, %c0_i32_0 : i32, i32
  }
  func.func @transform_3(%arg0: i32) -> (i32, i32) {
    %c0_i32 = arith.constant 0 : i32
    %c0_i32_0 = arith.constant 0 : i32
    %c0_i32_1 = arith.constant 0 : i32
    return %c0_i32, %c0_i32_0 : i32, i32
  }
  func.func @transform_4(%arg0: i32) -> (i32, i32) {
    %c0_i32 = arith.constant 0 : i32
    %c0_i32_0 = arith.constant 0 : i32
    %c0_i32_1 = arith.constant 0 : i32
    return %c0_i32, %c0_i32_0 : i32, i32
  }
  func.func @transform_5(%arg0: i32) -> (i32, i32) {
    %c0_i32 = arith.constant 0 : i32
    %c0_i32_0 = arith.constant 0 : i32
    %c0_i32_1 = arith.constant 0 : i32
    return %c0_i32, %c0_i32_0 : i32, i32
  }
  func.func @transform_6(%arg0: i32) -> (i32, i32) {
    %c0_i32 = arith.constant 0 : i32
    %c0_i32_0 = arith.constant 0 : i32
    %c0_i32_1 = arith.constant 0 : i32
    return %c0_i32, %c0_i32_0 : i32, i32
  }
  func.func @transform_7(%arg0: i32) -> (i32, i32) {
    %c0_i32 = arith.constant 0 : i32
    %c0_i32_0 = arith.constant 0 : i32
    return %arg0, %c0_i32 : i32, i32
  }
}

</mosaic_0001>

<llo_original>
// kernel: qnetwork_forward_pallas.1
$region0: #{qnetwork_forward_pallas.1}
  #allocation0 [shape = 'u32[]', space=smem, size = 0x4, offset = 0x4, fixed_abs, tag = 'smem constant byte address 0x4 - core index']
  #allocation1 [shape = 'u32[144,128]{1,0:T(1,128)}', space=vmem, size = 0x12000, scoped, tag = 'internal scratch']
  %s0 = inlined_call_operand.vmem [shape: f32[8,4], index: 0, kind: input, shape index: {}]
  %s1 = inlined_call_operand.vmem [shape: bf16[4,64], index: 1, kind: input, shape index: {}]
  %s2 = inlined_call_operand.vmem [shape: f32[1,64], index: 2, kind: input, shape index: {}]
  %s3 = inlined_call_operand.vmem [shape: bf16[64,64], index: 3, kind: input, shape index: {}]
  %s4 = inlined_call_operand.vmem [shape: f32[1,64], index: 4, kind: input, shape index: {}]
  %s5 = inlined_call_operand.vmem [shape: bf16[64,2], index: 5, kind: input, shape index: {}]
  %s6 = inlined_call_operand.vmem [shape: f32[1,2], index: 6, kind: input, shape index: {}]
  %s7 = inlined_call_operand.vmem [shape: f32[8,2], index: 7, kind: output, shape index: {}]
  %s8 = sld [smem:[#allocation0]]
  $region38: #{qnetwork_forward_pallas.1} parent=0
    _
  %s10 = ssub.s32 1, %s8
  %s11 = scalar_select 0, %s10, %s8
  // Predicated region
  $region2: #{qnetwork_forward_pallas.1} parent=0 // pred_check
    _
  $region3: #{qnetwork_forward_pallas.1} parent=0 // pred_check_branch
    %13 = sbr.rel (0) target = $region5
  $region4: #{qnetwork_forward_pallas.1} parent=0 // pred_region
    _
  $region5: #{qnetwork_forward_pallas.1} parent=0 // pred_fallthru
    _
  // Predicated region
  $region6: #{qnetwork_forward_pallas.1} parent=0 // pred_check
    _
  $region7: #{qnetwork_forward_pallas.1} parent=0 // pred_check_branch
    %15 = sbr.rel (0) target = $region9
  $region8: #{qnetwork_forward_pallas.1} parent=0 // pred_region
    _
  $region9: #{qnetwork_forward_pallas.1} parent=0 // pred_fallthru
    _
  // Predicated region
  $region10: #{qnetwork_forward_pallas.1} parent=0 // pred_check
    _
  $region11: #{qnetwork_forward_pallas.1} parent=0 // pred_check_branch
    %17 = sbr.rel (0) target = $region13
  $region12: #{qnetwork_forward_pallas.1} parent=0 // pred_region
    _
  $region13: #{qnetwork_forward_pallas.1} parent=0 // pred_fallthru
    _
  // Predicated region
  $region14: #{qnetwork_forward_pallas.1} parent=0 // pred_check
    _
  $region15: #{qnetwork_forward_pallas.1} parent=0 // pred_check_branch
    %19 = sbr.rel (0) target = $region17
  $region16: #{qnetwork_forward_pallas.1} parent=0 // pred_region
    _
  $region17: #{qnetwork_forward_pallas.1} parent=0 // pred_fallthru
    _
  // Predicated region
  $region18: #{qnetwork_forward_pallas.1} parent=0 // pred_check
    _
  $region19: #{qnetwork_forward_pallas.1} parent=0 // pred_check_branch
    %21 = sbr.rel (0) target = $region21
  $region20: #{qnetwork_forward_pallas.1} parent=0 // pred_region
    _
  $region21: #{qnetwork_forward_pallas.1} parent=0 // pred_fallthru
    _
  // Predicated region
  $region22: #{qnetwork_forward_pallas.1} parent=0 // pred_check
    _
  $region23: #{qnetwork_forward_pallas.1} parent=0 // pred_check_branch
    %23 = sbr.rel (0) target = $region25
  $region24: #{qnetwork_forward_pallas.1} parent=0 // pred_region
    _
  $region25: #{qnetwork_forward_pallas.1} parent=0 // pred_fallthru
    _
  // Predicated region
  $region26: #{qnetwork_forward_pallas.1} parent=0 // pred_check
    _
  $region27: #{qnetwork_forward_pallas.1} parent=0 // pred_check_branch
    %25 = sbr.rel (0) target = $region29
  $region28: #{qnetwork_forward_pallas.1} parent=0 // pred_region
    _
  $region29: #{qnetwork_forward_pallas.1} parent=0 // pred_fallthru
    _
  %v27 = vld [vmem:[%s0] sm:$0xff]
  %v28 = vpack.c.bf16 %v27, %v27
  %v29 = vld [vmem:[%s1] sm:$0x3]
  %v30 = vld [vmem:[%s2] sm:$0x1]
  %v32 = vlaneseq
  %v33 = vshrl.u32 %v32, 7
  %v34 = vsub.s32 0, %v33
  %v35 = vrot.slane %v30, %v34
  %vm37 = vcmask 31744
  %v39 = vsel %vm37, %v28, 0
  %vm41 = vcmask 1041408
  %v43 = vsel %vm41, %v29, 0
  %45 = vmatprep.subr.bf16.mxu0 0
  %46 = vmatpush1.bf16.msra.mxu0 %v43
  %47 = vmatprep.subr.bf16.mxu0 0
  %48 = vmatpush1.bf16.msra.mxu0 0
  %49 = vmatprep.subr.bf16.mxu0 0
  %50 = vmatpush1.bf16.msra.mxu0 0
  %51 = vmatprep.subr.bf16.mxu0 0
  %52 = vmatpush1.bf16.msra.mxu0 0
  %53 = vmatprep.subr.bf16.mxu0 0
  %54 = vmatpush1.bf16.msra.mxu0 0
  %55 = vmatprep.subr.bf16.mxu0 0
  %56 = vmatpush1.bf16.msra.mxu0 0
  %57 = vmatprep.subr.bf16.mxu0 0
  %58 = vmatpush1.bf16.msra.mxu0 0
  %59 = vmatprep.subr.bf16.mxu0 0
  %60 = vmatpush1.bf16.msra.mxu0 0
  %61 = vmatprep.subr.bf16.mxu0 0
  %62 = vmatpush1.bf16.msra.mxu0 0
  %63 = vmatprep.subr.bf16.mxu0 0
  %64 = vmatpush1.bf16.msra.mxu0 0
  %65 = vmatprep.subr.bf16.mxu0 0
  %66 = vmatpush1.bf16.msra.mxu0 0
  %67 = vmatprep.subr.bf16.mxu0 0
  %68 = vmatpush1.bf16.msra.mxu0 0
  %69 = vmatprep.subr.bf16.mxu0 0
  %70 = vmatpush1.bf16.msra.mxu0 0
  %71 = vmatprep.subr.bf16.mxu0 0
  %72 = vmatpush1.bf16.msra.mxu0 0
  %73 = vmatprep.subr.bf16.mxu0 0
  %74 = vmatpush1.bf16.msra.mxu0 0
  %75 = vmatprep.subr.bf16.mxu0 0
  %76 = vmatpush1.bf16.msra.mxu0 0
  %77 = vmatprep.mubr.bf16.mxu0 0
  %78 = vmatmul.mubr.bf16.gmra.mrb[0].mxu0 %v39
  %v79 = vpop.f32.mrb[0].mxu0
  %v80 = vadd.f32 %v35, %v79
  %v81 = vpop.f32.mrb[0].mxu0
  %v82 = vpop.f32.mrb[0].mxu0
  %v83 = vpop.f32.mrb[0].mxu0
  %84 = vdwg.mxu0
  %v85 = vmax.f32 %v80, 0.0
  %v86 = vpack.c.bf16 %v85, %v85
  %v87 = vld [vmem:[%s3] sm:$0xf]
  %v88 = vld [vmem:[%s3 + $0x4] sm:$0xf]
  %v89 = vld [vmem:[%s3 + $0x8] sm:$0xf]
  %v90 = vld [vmem:[%s3 + $0xc] sm:$0xf]
  %v91 = vld [vmem:[%s3 + $0x10] sm:$0xf]
  %v92 = vld [vmem:[%s3 + $0x14] sm:$0xf]
  %v93 = vld [vmem:[%s3 + $0x18] sm:$0xf]
  %v94 = vld [vmem:[%s3 + $0x1c] sm:$0xf]
  %v95 = vld [vmem:[%s4] sm:$0x1]
  %v97 = vlaneseq
  %v98 = vshrl.u32 %v97, 7
  %v99 = vsub.s32 0, %v98
  %v100 = vrot.slane %v95, %v99
  %v110 = vunpack.c.l.b16 %v87
  %v111 = vunpack.c.l.b16 %v88
  %v112 = vunpack.c.l.b16 %v89
  %v113 = vunpack.c.l.b16 %v90
  %v114 = vunpack.c.l.b16 %v91
  %v115 = vunpack.c.l.b16 %v92
  %v116 = vunpack.c.l.b16 %v93
  %v117 = vunpack.c.l.b16 %v94
  %v118 = vpack.c.b16 %v111, %v110
  %v119 = vpack.c.b16 %v113, %v112
  %v120 = vpack.c.b16 %v115, %v114
  %v121 = vpack.c.b16 %v117, %v116
  %vm126 = vcmask 523264
  %v128 = vsel %vm126, %v86, 0
  %130 = vmatprep.subr.bf16.mxu0 0
  %131 = vmatpush1.bf16.msra.mxu0 %v118
  %132 = vmatprep.subr.bf16.mxu0 0
  %133 = vmatpush1.bf16.msra.mxu0 %v119
  %134 = vmatprep.subr.bf16.mxu0 0
  %135 = vmatpush1.bf16.msra.mxu0 %v120
  %136 = vmatprep.subr.bf16.mxu0 0
  %137 = vmatpush1.bf16.msra.mxu0 %v121
  %138 = vmatprep.subr.bf16.mxu0 0
  %139 = vmatpush1.bf16.msra.mxu0 0
  %140 = vmatprep.subr.bf16.mxu0 0
  %141 = vmatpush1.bf16.msra.mxu0 0
  %142 = vmatprep.subr.bf16.mxu0 0
  %143 = vmatpush1.bf16.msra.mxu0 0
  %144 = vmatprep.subr.bf16.mxu0 0
  %145 = vmatpush1.bf16.msra.mxu0 0
  %146 = vmatprep.subr.bf16.mxu0 0
  %147 = vmatpush1.bf16.msra.mxu0 0
  %148 = vmatprep.subr.bf16.mxu0 0
  %149 = vmatpush1.bf16.msra.mxu0 0
  %150 = vmatprep.subr.bf16.mxu0 0
  %151 = vmatpush1.bf16.msra.mxu0 0
  %152 = vmatprep.subr.bf16.mxu0 0
  %153 = vmatpush1.bf16.msra.mxu0 0
  %154 = vmatprep.subr.bf16.mxu0 0
  %155 = vmatpush1.bf16.msra.mxu0 0
  %156 = vmatprep.subr.bf16.mxu0 0
  %157 = vmatpush1.bf16.msra.mxu0 0
  %158 = vmatprep.subr.bf16.mxu0 0
  %159 = vmatpush1.bf16.msra.mxu0 0
  %160 = vmatprep.subr.bf16.mxu0 0
  %161 = vmatpush1.bf16.msra.mxu0 0
  %162 = vmatprep.mubr.bf16.mxu0 0
  %163 = vmatmul.mubr.bf16.gmra.mrb[0].mxu0 %v128
  %v164 = vpop.f32.mrb[0].mxu0
  %v165 = vadd.f32 %v100, %v164
  %v166 = vpop.f32.mrb[0].mxu0
  %v167 = vpop.f32.mrb[0].mxu0
  %v168 = vpop.f32.mrb[0].mxu0
  %169 = vdwg.mxu0
  %v170 = vmax.f32 %v165, 0.0
  %v171 = vpack.c.bf16 %v170, %v170
  %v172 = vld [vmem:[%s5] sm:$0xf]
  %v173 = vld [vmem:[%s5 + $0x4] sm:$0xf]
  %v174 = vld [vmem:[%s5 + $0x8] sm:$0xf]
  %v175 = vld [vmem:[%s5 + $0xc] sm:$0xf]
  %v176 = vld [vmem:[%s5 + $0x10] sm:$0xf]
  %v177 = vld [vmem:[%s5 + $0x14] sm:$0xf]
  %v178 = vld [vmem:[%s5 + $0x18] sm:$0xf]
  %v179 = vld [vmem:[%s5 + $0x1c] sm:$0xf]
  %v180 = vld [vmem:[%s6] sm:$0x1]
  %v182 = vlaneseq
  %v183 = vshrl.u32 %v182, 7
  %v184 = vsub.s32 0, %v183
  %v185 = vrot.slane %v180, %v184
  %v195 = vunpack.c.l.b16 %v172
  %v196 = vunpack.c.l.b16 %v173
  %v197 = vunpack.c.l.b16 %v174
  %v198 = vunpack.c.l.b16 %v175
  %v199 = vunpack.c.l.b16 %v176
  %v200 = vunpack.c.l.b16 %v177
  %v201 = vunpack.c.l.b16 %v178
  %v202 = vunpack.c.l.b16 %v179
  %v203 = vpack.c.b16 %v196, %v195
  %v204 = vpack.c.b16 %v198, %v197
  %v205 = vpack.c.b16 %v200, %v199
  %v206 = vpack.c.b16 %v202, %v201
  %v212 = vsel %vm126, %v171, 0
  %214 = vmatprep.subr.bf16.mxu0 0
  %215 = vmatpush1.bf16.msra.mxu0 %v203
  %216 = vmatprep.subr.bf16.mxu0 0
  %217 = vmatpush1.bf16.msra.mxu0 %v204
  %218 = vmatprep.subr.bf16.mxu0 0
  %219 = vmatpush1.bf16.msra.mxu0 %v205
  %220 = vmatprep.subr.bf16.mxu0 0
  %221 = vmatpush1.bf16.msra.mxu0 %v206
  %222 = vmatprep.subr.bf16.mxu0 0
  %223 = vmatpush1.bf16.msra.mxu0 0
  %224 = vmatprep.subr.bf16.mxu0 0
  %225 = vmatpush1.bf16.msra.mxu0 0
  %226 = vmatprep.subr.bf16.mxu0 0
  %227 = vmatpush1.bf16.msra.mxu0 0
  %228 = vmatprep.subr.bf16.mxu0 0
  %229 = vmatpush1.bf16.msra.mxu0 0
  %230 = vmatprep.subr.bf16.mxu0 0
  %231 = vmatpush1.bf16.msra.mxu0 0
  %232 = vmatprep.subr.bf16.mxu0 0
  %233 = vmatpush1.bf16.msra.mxu0 0
  %234 = vmatprep.subr.bf16.mxu0 0
  %235 = vmatpush1.bf16.msra.mxu0 0
  %236 = vmatprep.subr.bf16.mxu0 0
  %237 = vmatpush1.bf16.msra.mxu0 0
  %238 = vmatprep.subr.bf16.mxu0 0
  %239 = vmatpush1.bf16.msra.mxu0 0
  %240 = vmatprep.subr.bf16.mxu0 0
  %241 = vmatpush1.bf16.msra.mxu0 0
  %242 = vmatprep.subr.bf16.mxu0 0
  %243 = vmatpush1.bf16.msra.mxu0 0
  %244 = vmatprep.subr.bf16.mxu0 0
  %245 = vmatpush1.bf16.msra.mxu0 0
  %246 = vmatprep.mubr.bf16.mxu0 0
  %247 = vmatmul.mubr.bf16.gmra.mrb[0].mxu0 %v212
  %v248 = vpop.f32.mrb[0].mxu0
  %v249 = vadd.f32 %v185, %v248
  %v250 = vpop.f32.mrb[0].mxu0
  %v251 = vpop.f32.mrb[0].mxu0
  %v252 = vpop.f32.mrb[0].mxu0
  %253 = vdwg.mxu0
  %vm254 = vcmask 15360
  %255 = vst.msk [vmem:[%s7] sm:$0xff] %vm254, %v249
  // Predicated region
  $region30: #{qnetwork_forward_pallas.1} parent=0 // pred_check
    _
  $region31: #{qnetwork_forward_pallas.1} parent=0 // pred_check_branch
    %257 = sbr.rel (0) target = $region33
  $region32: #{qnetwork_forward_pallas.1} parent=0 // pred_region
    _
  $region33: #{qnetwork_forward_pallas.1} parent=0 // pred_fallthru
    _
  // Predicated region
  $region34: #{qnetwork_forward_pallas.1} parent=0 // pred_check
    _
  $region35: #{qnetwork_forward_pallas.1} parent=0 // pred_check_branch
    %259 = sbr.rel (0) target = $region37
  $region36: #{qnetwork_forward_pallas.1} parent=0 // pred_region
    _
  $region37: #{qnetwork_forward_pallas.1} parent=0 // pred_fallthru
    _

</llo_original>
